<compile_context>
chip_gen: v7x
topology: tpu7x:2x2x1
jax: 0.10.0
libtpu: 0.0.40
codegen_flags: <defaults>
</compile_context>

<pallas_src>
import jax
import jax.numpy as jnp
from jax.experimental import pallas as pl
from jax.experimental.pallas import tpu as pltpu


_A_INV_SCALE = 1.0 / 127.0   # fixed dequant scale; A_hat entries are in [0, 1]


# ---------------------------------------------------------------------------
# Kernels
# ---------------------------------------------------------------------------

def _accumulate(a_ref, hw_ref, acc_ref):
    """acc += A_tile(int8 -> bf16) @ HW_block(bf16), f32 accumulation."""
    k = pl.program_id(1)
    tk = a_ref.shape[1]

    @pl.when(k == 0)
    def _():
        acc_ref[...] = jnp.zeros_like(acc_ref)

    row0 = pl.multiple_of(k * tk, tk)
    hw_blk = hw_ref[pl.ds(row0, tk), :]
    acc_ref[...] += jnp.dot(a_ref[...].astype(jnp.bfloat16), hw_blk,
                            preferred_element_type=jnp.float32)


def _gcn_layer_kernel(a_ref, hw_ref, b_ref, out_ref, acc_ref):
    """One row tile of  out = tanh(A @ (H @ W) + b)."""
    _accumulate(a_ref, hw_ref, acc_ref)

    @pl.when(pl.program_id(1) == pl.num_programs(1) - 1)
    def _():
        z = acc_ref[...] * _A_INV_SCALE + b_ref[...]
        out_ref[...] = jnp.tanh(z).astype(out_ref.dtype)


def _gcn_final_kernel(a_ref, hw_ref, b_ref, wc_ref, bc_ref, out_ref, acc_ref):
    """Last GCN layer fused with the Linear classifier.

    wc_ref is the packed (128,128) classifier: columns 0..C-1 hold Wc, columns
    C..C+1 are an identity on the 2 embedding lanes, everything else zero.
    One matmul writes logits (lanes 0..C-1) and the tanh embedding (lanes
    C..C+1) into a single lane-dense output slab.
    """
    _accumulate(a_ref, hw_ref, acc_ref)

    @pl.when(pl.program_id(1) == pl.num_programs(1) - 1)
    def _():
        z = acc_ref[...] * _A_INV_SCALE + b_ref[...]
        h_new = jnp.tanh(z)
        out_ref[...] = (jnp.dot(h_new, wc_ref[...],
                                preferred_element_type=jnp.float32)
                        + bc_ref[...])


# ---------------------------------------------------------------------------
# Per-layer pallas_call wrapper
# ---------------------------------------------------------------------------

def _vmem_limit_bytes(n_pad, tm, tk):
    # 2x double-buffered int8 A tiles + double-buffered bf16 resident HW
    # + out tiles + f32 acc + headroom, capped below v7x's 64 MiB physical
    # VMEM (v5e/v6e have 128 MiB, so the cap is always safe).
    need = (2 * tm * tk               # A tiles (int8)
            + 2 * n_pad * 128 * 2     # HW (bf16, k-invariant resident)
            + 2 * tm * 128 * 4        # out tile (f32 worst case)
            + tm * 128 * 4            # acc scratch
            + (4 << 20))              # headroom
    return int(min(48 << 20, max(32 << 20, need)))


def _gcn_layer_call(a_q, hw, b, *, tm, tk, out_dtype, wc=None, bc=None):
    n_pad = a_q.shape[0]
    grid = (n_pad // tm, n_pad // tk)

    in_specs = [
        pl.BlockSpec((tm, tk), lambda i, k: (i, k)),        # int8 A tiles stream
        pl.BlockSpec((n_pad, 128), lambda i, k: (0, 0)),    # HW resident (bf16)
        pl.BlockSpec((1, 128), lambda i, k: (0, 0)),        # bias resident
    ]
    args = [a_q, hw, b]

    if wc is None:
        kernel = _gcn_layer_kernel
    else:
        kernel = _gcn_final_kernel
        in_specs += [
            pl.BlockSpec((128, 128), lambda i, k: (0, 0)),  # packed classifier
            pl.BlockSpec((1, 128), lambda i, k: (0, 0)),    # packed class. bias
        ]
        args += [wc, bc]

    return pl.pallas_call(
        kernel,
        out_shape=jax.ShapeDtypeStruct((n_pad, 128), out_dtype),
        grid_spec=pltpu.PrefetchScalarGridSpec(
            num_scalar_prefetch=0,
            grid=grid,
            in_specs=in_specs,
            out_specs=pl.BlockSpec((tm, 128), lambda i, k: (i, 0)),
            scratch_shapes=[pltpu.VMEM((tm, 128), jnp.float32)],
        ),
        compiler_params=pltpu.CompilerParams(
            dimension_semantics=("parallel", "arbitrary"),
            vmem_limit_bytes=_vmem_limit_bytes(n_pad, tm, tk),
        ),
    )(*args)


# ---------------------------------------------------------------------------
# Plain-JAX glue: normalized adjacency, params, padding
# ---------------------------------------------------------------------------

def build_norm_adj(edge_index, num_nodes):
    """Dense D^-1/2 (A + I) D^-1/2 from a [2, E] edge_index (PyG GCNConv defaults)."""
    src = edge_index[0]
    dst = edge_index[1]
    loop = jnp.arange(num_nodes, dtype=edge_index.dtype)
    src = jnp.concatenate([src, loop])
    dst = jnp.concatenate([dst, loop])
    ones = jnp.ones(src.shape[0], dtype=jnp.float32)
    deg = jnp.zeros((num_nodes,), jnp.float32).at[dst].add(ones)
    dinv = jnp.where(deg > 0, 1.0 / jnp.sqrt(deg), 0.0)
    norm = dinv[src] * dinv[dst]
    adj = jnp.zeros((num_nodes, num_nodes), jnp.float32).at[dst, src].add(norm)
    return adj


def glorot(key, shape):
    fan_in, fan_out = shape[0], shape[1]
    limit = jnp.sqrt(6.0 / (fan_in + fan_out))
    return jax.random.uniform(key, shape, jnp.float32, -limit, limit)


def init_params(key, num_features, num_classes):
    ks = jax.random.split(key, 4)
    return {
        "w1": glorot(ks[0], (num_features, 4)), "b1": jnp.zeros((1, 4), jnp.float32),
        "w2": glorot(ks[1], (4, 4)),            "b2": jnp.zeros((1, 4), jnp.float32),
        "w3": glorot(ks[2], (4, 2)),            "b3": jnp.zeros((1, 2), jnp.float32),
        "wc": glorot(ks[3], (2, num_classes)),
        "bc": jnp.zeros((1, num_classes), jnp.float32),
    }


def _round_up(x, m):
    return ((x + m - 1) // m) * m


def _pad2d(m, rows, cols):
    out = jnp.zeros((rows, cols), jnp.float32)
    return out.at[: m.shape[0], : m.shape[1]].set(m.astype(jnp.float32))


def gcn_model_forward(x, edge_index, params, num_classes, *, tile=1024):
    n, f = x.shape
    assert num_classes + 2 <= 128

    # Tiling: lane/sublane aligned; 1024^2 A tiles once N is large enough so
    # the ~0.35 us/grid-step overhead is small vs the A-tile DMA on all gens.
    if n <= tile:
        n_pad = max(128, _round_up(n, 128))
        tm = tk = n_pad
    else:
        n_pad = _round_up(n, tile)
        tm = tk = tile
    f_pad = max(128, _round_up(f, 128))

    # Dense normalized adjacency; entries lie in [0, 1] so a fixed scale of
    # 127 quantizes exactly into int8 (the 1/127 dequant is folded into the
    # kernels' finalize step).
    a_hat = build_norm_adj(edge_index, n)
    a_q = jnp.round(_pad2d(a_hat, n_pad, n_pad) * 127.0).astype(jnp.int8)

    # 128-lane-padded weights / biases (zero padding -> exact results).
    x_pad = _pad2d(x, n_pad, f_pad)
    w1 = _pad2d(params["w1"], f_pad, 128)
    w2 = _pad2d(params["w2"], 128, 128)
    w3 = _pad2d(params["w3"], 128, 128)
    b1 = _pad2d(params["b1"], 1, 128)
    b2 = _pad2d(params["b2"], 1, 128)
    b3 = _pad2d(params["b3"], 1, 128)

    # Packed classifier: columns 0..C-1 = Wc, columns C..C+1 pass the tanh
    # embedding through (identity on rows 0..1); all other entries are zero
    # by construction, so padded lanes can never corrupt the logits.
    wc = jnp.zeros((128, 128), jnp.float32)
    wc = wc.at[:2, :num_classes].set(params["wc"].astype(jnp.float32))
    wc = wc.at[0, num_classes].set(1.0)
    wc = wc.at[1, num_classes + 1].set(1.0)
    bc = jnp.zeros((1, 128), jnp.float32)
    bc = bc.at[0, :num_classes].set(params["bc"][0].astype(jnp.float32))

    # Per-layer dense transform H @ W precomputed once (tiny N x 128 x 128
    # matmul) and kept bf16 so the kernels see pure bf16 MXU operands.
    # Note: padded rows of h1/h2 hold tanh(b) rather than 0; harmless because
    # the corresponding A columns are zero and the wrapper slices the result.
    hw1 = jnp.dot(x_pad, w1, preferred_element_type=jnp.float32).astype(jnp.bfloat16)
    h1 = _gcn_layer_call(a_q, hw1, b1, tm=tm, tk=tk, out_dtype=jnp.bfloat16)

    hw2 = jnp.dot(h1, w2, preferred_element_type=jnp.float32).astype(jnp.bfloat16)
    h2 = _gcn_layer_call(a_q, hw2, b2, tm=tm, tk=tk, out_dtype=jnp.bfloat16)

    hw3 = jnp.dot(h2, w3, preferred_element_type=jnp.float32).astype(jnp.bfloat16)
    slab = _gcn_layer_call(a_q, hw3, b3, tm=tm, tk=tk, out_dtype=jnp.float32,
                           wc=wc, bc=bc)

    out = slab[:n, :num_classes]
    h = slab[:n, num_classes:num_classes + 2]
    return out, h


# ---------------------------------------------------------------------------
# Demo / self-check
# ---------------------------------------------------------------------------

if __name__ == "__main__":
    key = jax.random.PRNGKey(0)
    k_x, k_e, k_p = jax.random.split(key, 3)

    num_nodes = 16
    num_features = 8
    num_classes = 4
    num_edges = 32

    x = jax.random.normal(k_x, (num_nodes, num_features), dtype=jnp.float32)
    edge_index = jax.random.randint(k_e, (2, num_edges), 0, num_nodes,
                                    dtype=jnp.int32)
    params = init_params(k_p, num_features, num_classes)

    out, h = gcn_model_forward(x, edge_index, params, num_classes)
    jax.block_until_ready((out, h))

    assert out.shape == (num_nodes, num_classes)
    assert h.shape == (num_nodes, 2)

    def reference(adj):
        r = jnp.tanh(adj @ (x @ params["w1"]) + params["b1"])
        r = jnp.tanh(adj @ (r @ params["w2"]) + params["b2"])
        r = jnp.tanh(adj @ (r @ params["w3"]) + params["b3"])
        return r @ params["wc"] + params["bc"], r

    a_exact = build_norm_adj(edge_index, num_nodes)
    # Strict kernel-correctness check: reference uses the same int8-dequantized
    # A the kernel applies, so remaining error is just bf16 MXU operands.
    a_deq = jnp.round(a_exact * 127.0) / 127.0
    ref_out_q, ref_h_q = reference(a_deq)
    assert float(jnp.max(jnp.abs(out - ref_out_q))) < 0.05
    assert float(jnp.max(jnp.abs(h - ref_h_q))) < 0.05

    # End-to-end accuracy vs the exact f32 A_hat (tolerance loosened to cover
    # the int8-A quantization + bf16 error; strict check is the one above).
    ref_out, ref_h = reference(a_exact)
    assert float(jnp.max(jnp.abs(out - ref_out))) < 0.15
    assert float(jnp.max(jnp.abs(h - ref_h))) < 0.15

    print("KERNEL_OK")
</pallas_src>

<mosaic_0001>
module attributes {stable_mosaic.version = 11 : i64} {
  func.func @_gcn_layer_kernel(%arg0: i32, %arg1: i32, %arg2: memref<128x128xi8, #tpu.memory_space<vmem>>, %arg3: memref<128x128xbf16, #tpu.memory_space<vmem>>, %arg4: memref<1x128xf32, #tpu.memory_space<vmem>>, %arg5: memref<128x128xbf16, #tpu.memory_space<vmem>>, %arg6: memref<128x128xf32, #tpu.memory_space<vmem>>) attributes {dimension_semantics = [#tpu.dimension_semantics<parallel>, #tpu.dimension_semantics<arbitrary>], iteration_bounds = array<i64: 1, 1>, scalar_prefetch = 0 : i64, scratch_operands = 1 : i64, tpu.core_type = #tpu.core_type<tc>, window_params = [{transform_indices = @transform_0, window_bounds = array<i64: 128, 128>}, {pipeline_mode = #tpu.pipeline_mode<synchronous>, transform_indices = @transform_1, window_bounds = array<i64: 128, 128>}, {pipeline_mode = #tpu.pipeline_mode<synchronous>, transform_indices = @transform_2, window_bounds = array<i64: 1, 128>}, {transform_indices = @transform_3, window_bounds = array<i64: 128, 128>}]} {
    %c0_i32 = arith.constant 0 : i32
    %0 = arith.cmpi eq, %arg1, %c0_i32 : i32
    %1 = arith.extui %0 : i1 to i32
    %c0_i32_0 = arith.constant 0 : i32
    %2 = arith.cmpi ne, %1, %c0_i32_0 : i32
    scf.if %2 {
      %cst_9 = arith.constant 0.000000e+00 : f32
      %16 = vector.broadcast %cst_9 : f32 to vector<128x128xf32>
      %c0_10 = arith.constant 0 : index
      %c0_11 = arith.constant 0 : index
      %17 = vector.load %arg6[%c0_10, %c0_11] : memref<128x128xf32, #tpu.memory_space<vmem>>, vector<128x128xf32>
      tpu.vector_store %arg6[%c0_10, %c0_11], %16 {strides = array<i32>} : memref<128x128xf32, #tpu.memory_space<vmem>>, vector<128x128xf32>,
    } else {
    }
    %c128_i32 = arith.constant 128 : i32
    %3 = arith.muli %arg1, %c128_i32 : i32
    %4 = tpu.assume_multiple %3, 128 : i32
    %5 = arith.index_cast %4 : i32 to index
    %c0 = arith.constant 0 : index
    %6 = vector.load %arg3[%5, %c0] : memref<128x128xbf16, #tpu.memory_space<vmem>>, vector<128x128xbf16>
    %c0_1 = arith.constant 0 : index
    %c0_2 = arith.constant 0 : index
    %7 = vector.load %arg6[%c0_1, %c0_2] : memref<128x128xf32, #tpu.memory_space<vmem>>, vector<128x128xf32>
    %c0_3 = arith.constant 0 : index
    %c0_4 = arith.constant 0 : index
    %8 = vector.load %arg2[%c0_3, %c0_4] : memref<128x128xi8, #tpu.memory_space<vmem>>, vector<128x128xi8>
    %9 = arith.sitofp %8 : vector<128x128xi8> to vector<128x128xbf16>
    %cst = arith.constant dense<0.000000e+00> : vector<128x128xf32>
    %10 = tpu.matmul %9, %6, %cst {dimension_numbers = #tpu.dot_dimension_numbers<[1], [0], [0], [1], [0, 0, 1, 1], [], []>} : vector<128x128xbf16>, vector<128x128xbf16>, vector<128x128xf32> -> vector<128x128xf32>
    %11 = arith.addf %7, %10 : vector<128x128xf32>
    %c0_5 = arith.constant 0 : index
    %c0_6 = arith.constant 0 : index
    %12 = vector.load %arg6[%c0_5, %c0_6] : memref<128x128xf32, #tpu.memory_space<vmem>>, vector<128x128xf32>
    tpu.vector_store %arg6[%c0_5, %c0_6], %11 {strides = array<i32>} : memref<128x128xf32, #tpu.memory_space<vmem>>, vector<128x128xf32>,
    %c0_i32_7 = arith.constant 0 : i32
    %13 = arith.cmpi eq, %arg1, %c0_i32_7 : i32
    %14 = arith.extui %13 : i1 to i32
    %c0_i32_8 = arith.constant 0 : i32
    %15 = arith.cmpi ne, %14, %c0_i32_8 : i32
    scf.if %15 {
      %c0_9 = arith.constant 0 : index
      %c0_10 = arith.constant 0 : index
      %16 = vector.load %arg6[%c0_9, %c0_10] : memref<128x128xf32, #tpu.memory_space<vmem>>, vector<128x128xf32>
      %cst_11 = arith.constant 0.00787401571 : f32
      %17 = vector.broadcast %cst_11 : f32 to vector<128x128xf32>
      %18 = arith.mulf %16, %17 : vector<128x128xf32>
      %c0_12 = arith.constant 0 : index
      %c0_13 = arith.constant 0 : index
      %19 = vector.load %arg4[%c0_12, %c0_13] : memref<1x128xf32, #tpu.memory_space<vmem>>, vector<1x128xf32>
      %20 = vector.broadcast %19 : vector<1x128xf32> to vector<128x128xf32>
      %21 = arith.addf %18, %20 : vector<128x128xf32>
      %22 = math.tanh %21 : vector<128x128xf32>
      %23 = arith.truncf %22 : vector<128x128xf32> to vector<128x128xbf16>
      %c0_14 = arith.constant 0 : index
      %c0_15 = arith.constant 0 : index
      %24 = vector.load %arg5[%c0_14, %c0_15] : memref<128x128xbf16, #tpu.memory_space<vmem>>, vector<128x128xbf16>
      tpu.vector_store %arg5[%c0_14, %c0_15], %23 {strides = array<i32>} : memref<128x128xbf16, #tpu.memory_space<vmem>>, vector<128x128xbf16>,
    } else {
    }
    return
  }
  func.func @transform_0(%arg0: i32, %arg1: i32) -> (i32, i32) {
    %c0_i32 = arith.constant 0 : i32
    return %arg0, %arg1 : i32, i32
  }
  func.func @transform_1(%arg0: i32, %arg1: i32) -> (i32, i32) {
    %c0_i32 = arith.constant 0 : i32
    %c0_i32_0 = arith.constant 0 : i32
    %c0_i32_1 = arith.constant 0 : i32
    return %c0_i32, %c0_i32_0 : i32, i32
  }
  func.func @transform_2(%arg0: i32, %arg1: i32) -> (i32, i32) {
    %c0_i32 = arith.constant 0 : i32
    %c0_i32_0 = arith.constant 0 : i32
    %c0_i32_1 = arith.constant 0 : i32
    return %c0_i32, %c0_i32_0 : i32, i32
  }
  func.func @transform_3(%arg0: i32, %arg1: i32) -> (i32, i32) {
    %c0_i32 = arith.constant 0 : i32
    %c0_i32_0 = arith.constant 0 : i32
    return %arg0, %c0_i32 : i32, i32
  }
}

</mosaic_0001>

<llo_original>
// kernel: tpu_custom_call.1
$region0: #{tpu_custom_call.1}
  #allocation0 [shape = 'u32[]', space=smem, size = 0x4, offset = 0x4, fixed_abs, tag = 'smem constant byte address 0x4 - core index']
  #allocation1 [shape = 'u32[144,128]{1,0:T(1,128)}', space=vmem, size = 0x12000, scoped, tag = 'internal scratch']
  #allocation2 [shape = 'f32[128,128]{1,0:T(8,128)}', space=vmem, size = 0x10000, scoped, tag = 'scratch operand']
  %s0 = inlined_call_operand.hbm [shape: s8[128,128], index: 0, kind: input, shape index: {}]
  %s1 = inlined_call_operand.hbm [shape: bf16[128,128], index: 1, kind: input, shape index: {}]
  %s2 = inlined_call_operand.vmem [shape: f32[1,128], index: 2, kind: input, shape index: {}]
  %s3 = inlined_call_operand.hbm [shape: bf16[128,128], index: 3, kind: output, shape index: {}]
  %s4 = sld [smem:[#allocation0]]
  $region38: #{tpu_custom_call.1} parent=0
    _
  %s6 = ssub.s32 1, %s4
  %s7 = scalar_select 0, %s6, %s4
  $region1: #{tpu_custom_call.1} parent=0
    #allocation3 [shape = 'u8[16384]{0}', space=vmem, size = 0x4000, scoped, tag = 'input window, operand 0, single buffered']
    #allocation4 [shape = 's32[1]{0}', space=sflag, size = 0x4, scoped, tag = 'scoped memory for tpu_custom_call.1']
    #allocation5 [shape = 's32[1]{0}', space=sflag, size = 0x4, scoped, tag = 'scoped memory for tpu_custom_call.1']
    #allocation6 [shape = 'u8[32768]{0}', space=vmem, size = 0x8000, scoped, tag = 'input window, operand 1, single buffered']
    #allocation7 [shape = 's32[1]{0}', space=sflag, size = 0x4, scoped, tag = 'scoped memory for tpu_custom_call.1']
    #allocation8 [shape = 'u8[32768]{0}', space=vmem, size = 0x8000, scoped, tag = 'output window, operand 0, single buffered']
    %8 = vsyncpa [#allocation4], 0
    %9 = vsyncpa [#allocation7], 0
    %10 = vsyncpa [#allocation5], 0
    // Predicated region
    $region2: #{tpu_custom_call.1} parent=1 // pred_check
      _
    $region3: #{tpu_custom_call.1} parent=1 // pred_check_branch
      %12 = sbr.rel (0) target = $region5
    $region4: #{tpu_custom_call.1} parent=1 // pred_region
      %s14 = ssub.s32 512, 512
      %15 = vsyncadd [#allocation4], %s14
      %s16 = sshll.u32 [#allocation3], 4
      %s17 = int_to_ptr.vmem [resolvable:$true] %s16
      %22 = dma.hbm_to_vmem [thread:$0]  %s0, 512, %s17, [#allocation4], 128, 128, 8
    $region5: #{tpu_custom_call.1} parent=1 // pred_fallthru
      _
    // Predicated region
    $region6: #{tpu_custom_call.1} parent=1 // pred_check
      _
    $region7: #{tpu_custom_call.1} parent=1 // pred_check_branch
      %24 = sbr.rel (0) target = $region9
    $region8: #{tpu_custom_call.1} parent=1 // pred_region
      %s26 = ssub.s32 1024, 1024
      %27 = vsyncadd [#allocation7], %s26
      %s28 = sshll.u32 [#allocation6], 4
      %s29 = int_to_ptr.vmem [resolvable:$true] %s28
      %34 = dma.hbm_to_vmem [thread:$0]  %s1, 1024, %s29, [#allocation7], 64, 64, 4
    $region9: #{tpu_custom_call.1} parent=1 // pred_fallthru
      _
    // Predicated region
    $region10: #{tpu_custom_call.1} parent=1 // pred_check
      _
    $region11: #{tpu_custom_call.1} parent=1 // pred_check_branch
      %36 = sbr.rel (0) target = $region13
    $region12: #{tpu_custom_call.1} parent=1 // pred_region
      _
    $region13: #{tpu_custom_call.1} parent=1 // pred_fallthru
      _
    // Predicated region
    $region14: #{tpu_custom_call.1} parent=1 // pred_check
      _
    $region15: #{tpu_custom_call.1} parent=1 // pred_check_branch
      %38 = sbr.rel (0) target = $region17
    $region16: #{tpu_custom_call.1} parent=1 // pred_region
      %39 = dma.done [#allocation4], 512
    $region17: #{tpu_custom_call.1} parent=1 // pred_fallthru
      _
    // Predicated region
    $region18: #{tpu_custom_call.1} parent=1 // pred_check
      _
    $region19: #{tpu_custom_call.1} parent=1 // pred_check_branch
      %41 = sbr.rel (0) target = $region21
    $region20: #{tpu_custom_call.1} parent=1 // pred_region
      %42 = dma.done [#allocation7], 1024
    $region21: #{tpu_custom_call.1} parent=1 // pred_fallthru
      _
    %p44 = scmp.eq.s32.totalorder 0, 0
    // Predicated region
    $region22: #{tpu_custom_call.1} parent=1 // pred_check
      %p45 = pneg %p44
    $region23: #{tpu_custom_call.1} parent=1 // pred_check_branch
      %47 = sbr.rel (%p45) target = $region25
    $region24: #{tpu_custom_call.1} parent=1 // pred_region
      %48 = vst [vmem:[#allocation2] sm:$0xff] 0.0
      %49 = vst [vmem:[#allocation2 + $0x8] sm:$0xff] 0.0
      %50 = vst [vmem:[#allocation2 + $0x10] sm:$0xff] 0.0
      %51 = vst [vmem:[#allocation2 + $0x18] sm:$0xff] 0.0
      %52 = vst [vmem:[#allocation2 + $0x20] sm:$0xff] 0.0
      %53 = vst [vmem:[#allocation2 + $0x28] sm:$0xff] 0.0
      %54 = vst [vmem:[#allocation2 + $0x30] sm:$0xff] 0.0
      %55 = vst [vmem:[#allocation2 + $0x38] sm:$0xff] 0.0
      %56 = vst [vmem:[#allocation2 + $0x40] sm:$0xff] 0.0
      %57 = vst [vmem:[#allocation2 + $0x48] sm:$0xff] 0.0
      %58 = vst [vmem:[#allocation2 + $0x50] sm:$0xff] 0.0
      %59 = vst [vmem:[#allocation2 + $0x58] sm:$0xff] 0.0
      %60 = vst [vmem:[#allocation2 + $0x60] sm:$0xff] 0.0
      %61 = vst [vmem:[#allocation2 + $0x68] sm:$0xff] 0.0
      %62 = vst [vmem:[#allocation2 + $0x70] sm:$0xff] 0.0
      %63 = vst [vmem:[#allocation2 + $0x78] sm:$0xff] 0.0
    $region25: #{tpu_custom_call.1} parent=1 // pred_fallthru
      _
    %s64 = smul.u32 0, 128
    %s65 = sshra.s32 %s64, 3
    %s66 = sand.u32 %s64, 7
    %s67 = smul.addr %s65, 4
    %s68 = scalar_lea.vmem [#allocation6], %s67
    %v69 = vld [vmem:[%s68] sm:$0xf]
    %v70 = vld [vmem:[%s68 + $0x4] sm:$0xf]
    %v71 = vld [vmem:[%s68 + $0x8] sm:$0xf]
    %v72 = vld [vmem:[%s68 + $0xc] sm:$0xf]
    %v73 = vld [vmem:[%s68 + $0x10] sm:$0xf]
    %v74 = vld [vmem:[%s68 + $0x14] sm:$0xf]
    %v75 = vld [vmem:[%s68 + $0x18] sm:$0xf]
    %v76 = vld [vmem:[%s68 + $0x1c] sm:$0xf]
    %v77 = vld [vmem:[%s68 + $0x20] sm:$0xf]
    %v78 = vld [vmem:[%s68 + $0x24] sm:$0xf]
    %v79 = vld [vmem:[%s68 + $0x28] sm:$0xf]
    %v80 = vld [vmem:[%s68 + $0x2c] sm:$0xf]
    %v81 = vld [vmem:[%s68 + $0x30] sm:$0xf]
    %v82 = vld [vmem:[%s68 + $0x34] sm:$0xf]
    %v83 = vld [vmem:[%s68 + $0x38] sm:$0xf]
    %v84 = vld [vmem:[%s68 + $0x3c] sm:$0xf]
    %v85 = vld [vmem:[#allocation2] sm:$0xff]
    %v86 = vld [vmem:[#allocation2 + $0x8] sm:$0xff]
    %v87 = vld [vmem:[#allocation2 + $0x10] sm:$0xff]
    %v88 = vld [vmem:[#allocation2 + $0x18] sm:$0xff]
    %v89 = vld [vmem:[#allocation2 + $0x20] sm:$0xff]
    %v90 = vld [vmem:[#allocation2 + $0x28] sm:$0xff]
    %v91 = vld [vmem:[#allocation2 + $0x30] sm:$0xff]
    %v92 = vld [vmem:[#allocation2 + $0x38] sm:$0xff]
    %v93 = vld [vmem:[#allocation2 + $0x40] sm:$0xff]
    %v94 = vld [vmem:[#allocation2 + $0x48] sm:$0xff]
    %v95 = vld [vmem:[#allocation2 + $0x50] sm:$0xff]
    %v96 = vld [vmem:[#allocation2 + $0x58] sm:$0xff]
    %v97 = vld [vmem:[#allocation2 + $0x60] sm:$0xff]
    %v98 = vld [vmem:[#allocation2 + $0x68] sm:$0xff]
    %v99 = vld [vmem:[#allocation2 + $0x70] sm:$0xff]
    %v100 = vld [vmem:[#allocation2 + $0x78] sm:$0xff]
    %v101 = vld [vmem:[#allocation3] sm:$0xff]
    %v102 = vld [vmem:[#allocation3 + $0x8] sm:$0xff]
    %v103 = vld [vmem:[#allocation3 + $0x10] sm:$0xff]
    %v104 = vld [vmem:[#allocation3 + $0x18] sm:$0xff]
    %v105 = vunpack.c.l.s8.bf16 %v101
    %v106 = vunpack.c.h.s8.bf16 %v101
    %v107 = vunpack.c.l.s8.bf16 %v102
    %v108 = vunpack.c.h.s8.bf16 %v102
    %v109 = vunpack.c.l.s8.bf16 %v103
    %v110 = vunpack.c.h.s8.bf16 %v103
    %v111 = vunpack.c.l.s8.bf16 %v104
    %v112 = vunpack.c.h.s8.bf16 %v104
    %v129 = vunpack.c.l.b16 %v69
    %v130 = vunpack.c.l.b16 %v70
    %v131 = vunpack.c.l.b16 %v71
    %v132 = vunpack.c.l.b16 %v72
    %v133 = vunpack.c.l.b16 %v73
    %v134 = vunpack.c.l.b16 %v74
    %v135 = vunpack.c.l.b16 %v75
    %v136 = vunpack.c.l.b16 %v76
    %v137 = vunpack.c.l.b16 %v77
    %v138 = vunpack.c.l.b16 %v78
    %v139 = vunpack.c.l.b16 %v79
    %v140 = vunpack.c.l.b16 %v80
    %v141 = vunpack.c.l.b16 %v81
    %v142 = vunpack.c.l.b16 %v82
    %v143 = vunpack.c.l.b16 %v83
    %v144 = vunpack.c.l.b16 %v84
    %v145 = vpack.c.b16 %v130, %v129
    %v146 = vpack.c.b16 %v132, %v131
    %v147 = vpack.c.b16 %v134, %v133
    %v148 = vpack.c.b16 %v136, %v135
    %v149 = vpack.c.b16 %v138, %v137
    %v150 = vpack.c.b16 %v140, %v139
    %v151 = vpack.c.b16 %v142, %v141
    %v152 = vpack.c.b16 %v144, %v143
    %161 = vmatprep.subr.bf16.mxu0 0
    %162 = vmatpush1.bf16.msra.mxu0 %v145
    %163 = vmatprep.subr.bf16.mxu0 0
    %164 = vmatpush1.bf16.msra.mxu0 %v146
    %165 = vmatprep.subr.bf16.mxu0 0
    %166 = vmatpush1.bf16.msra.mxu0 %v147
    %167 = vmatprep.subr.bf16.mxu0 0
    %168 = vmatpush1.bf16.msra.mxu0 %v148
    %169 = vmatprep.subr.bf16.mxu0 0
    %170 = vmatpush1.bf16.msra.mxu0 %v149
    %171 = vmatprep.subr.bf16.mxu0 0
    %172 = vmatpush1.bf16.msra.mxu0 %v150
    %173 = vmatprep.subr.bf16.mxu0 0
    %174 = vmatpush1.bf16.msra.mxu0 %v151
    %175 = vmatprep.subr.bf16.mxu0 0
    %176 = vmatpush1.bf16.msra.mxu0 %v152
    %177 = vmatprep.subr.bf16.mxu0 0
    %178 = vmatpush1.bf16.msra.mxu0 0
    %179 = vmatprep.subr.bf16.mxu0 0
    %180 = vmatpush1.bf16.msra.mxu0 0
    %181 = vmatprep.subr.bf16.mxu0 0
    %182 = vmatpush1.bf16.msra.mxu0 0
    %183 = vmatprep.subr.bf16.mxu0 0
    %184 = vmatpush1.bf16.msra.mxu0 0
    %185 = vmatprep.subr.bf16.mxu0 0
    %186 = vmatpush1.bf16.msra.mxu0 0
    %187 = vmatprep.subr.bf16.mxu0 0
    %188 = vmatpush1.bf16.msra.mxu0 0
    %189 = vmatprep.subr.bf16.mxu0 0
    %190 = vmatpush1.bf16.msra.mxu0 0
    %191 = vmatprep.subr.bf16.mxu0 0
    %192 = vmatpush1.bf16.msra.mxu0 0
    %193 = vmatprep.mubr.bf16.mxu0 0
    %194 = vmatmul.mubr.bf16.gmra.mrb[0].mxu0 %v105
    %v195 = vpop.f32.mrb[0].mxu0
    %v196 = vadd.f32 0.0, %v195
    %v197 = vpop.f32.mrb[0].mxu0
    %v198 = vpop.f32.mrb[0].mxu0
    %v199 = vadd.f32 0.0, %v198
    %v200 = vpop.f32.mrb[0].mxu0
    %201 = vmatprep.mubr.bf16.mxu0 0
    %202 = vmatmul.mubr.bf16.gmra.mrb[0].mxu0 %v106
    %v203 = vpop.f32.mrb[0].mxu0
    %v204 = vadd.f32 0.0, %v203
    %v205 = vpop.f32.mrb[0].mxu0
    %v206 = vpop.f32.mrb[0].mxu0
    %v207 = vadd.f32 0.0, %v206
    %v208 = vpop.f32.mrb[0].mxu0
    %209 = vmatprep.mubr.bf16.mxu0 0
    %210 = vmatmul.mubr.bf16.gmra.mrb[0].mxu0 %v107
    %v211 = vpop.f32.mrb[0].mxu0
    %v212 = vadd.f32 0.0, %v211
    %v213 = vpop.f32.mrb[0].mxu0
    %v214 = vpop.f32.mrb[0].mxu0
    %v215 = vadd.f32 0.0, %v214
    %v216 = vpop.f32.mrb[0].mxu0
    %217 = vmatprep.mubr.bf16.mxu0 0
    %218 = vmatmul.mubr.bf16.gmra.mrb[0].mxu0 %v108
    %v219 = vpop.f32.mrb[0].mxu0
    %v220 = vadd.f32 0.0, %v219
    %v221 = vpop.f32.mrb[0].mxu0
    %v222 = vpop.f32.mrb[0].mxu0
    %v223 = vadd.f32 0.0, %v222
    %v224 = vpop.f32.mrb[0].mxu0
    %225 = vmatprep.mubr.bf16.mxu0 0
    %226 = vmatmul.mubr.bf16.gmra.mrb[0].mxu0 %v109
    %v227 = vpop.f32.mrb[0].mxu0
    %v228 = vadd.f32 0.0, %v227
    %v229 = vpop.f32.mrb[0].mxu0
    %v230 = vpop.f32.mrb[0].mxu0
    %v231 = vadd.f32 0.0, %v230
    %v232 = vpop.f32.mrb[0].mxu0
    %233 = vmatprep.mubr.bf16.mxu0 0
    %234 = vmatmul.mubr.bf16.gmra.mrb[0].mxu0 %v110
    %v235 = vpop.f32.mrb[0].mxu0
    %v236 = vadd.f32 0.0, %v235
    %v237 = vpop.f32.mrb[0].mxu0
    %v238 = vpop.f32.mrb[0].mxu0
    %v239 = vadd.f32 0.0, %v238
    %v240 = vpop.f32.mrb[0].mxu0
    %241 = vmatprep.mubr.bf16.mxu0 0
    %242 = vmatmul.mubr.bf16.gmra.mrb[0].mxu0 %v111
    %v243 = vpop.f32.mrb[0].mxu0
    %v244 = vadd.f32 0.0, %v243
    %v245 = vpop.f32.mrb[0].mxu0
    %v246 = vpop.f32.mrb[0].mxu0
    %v247 = vadd.f32 0.0, %v246
    %v248 = vpop.f32.mrb[0].mxu0
    %249 = vmatprep.mubr.bf16.mxu0 0
    %250 = vmatmul.mubr.bf16.gmra.mrb[0].mxu0 %v112
    %v251 = vpop.f32.mrb[0].mxu0
    %v252 = vadd.f32 0.0, %v251
    %v253 = vpop.f32.mrb[0].mxu0
    %v254 = vpop.f32.mrb[0].mxu0
    %v255 = vadd.f32 0.0, %v254
    %v256 = vpop.f32.mrb[0].mxu0
    %257 = vdwg.mxu0
    %v258 = vadd.f32 %v85, %v196
    %v259 = vadd.f32 %v86, %v199
    %v260 = vadd.f32 %v87, %v204
    %v261 = vadd.f32 %v88, %v207
    %v262 = vadd.f32 %v89, %v212
    %v263 = vadd.f32 %v90, %v215
    %v264 = vadd.f32 %v91, %v220
    %v265 = vadd.f32 %v92, %v223
    %v266 = vadd.f32 %v93, %v228
    %v267 = vadd.f32 %v94, %v231
    %v268 = vadd.f32 %v95, %v236
    %v269 = vadd.f32 %v96, %v239
    %v270 = vadd.f32 %v97, %v244
    %v271 = vadd.f32 %v98, %v247
    %v272 = vadd.f32 %v99, %v252
    %v273 = vadd.f32 %v100, %v255
    %274 = vst [vmem:[#allocation2] sm:$0xff] %v258
    %275 = vst [vmem:[#allocation2 + $0x8] sm:$0xff] %v259
    %276 = vst [vmem:[#allocation2 + $0x10] sm:$0xff] %v260
    %277 = vst [vmem:[#allocation2 + $0x18] sm:$0xff] %v261
    %278 = vst [vmem:[#allocation2 + $0x20] sm:$0xff] %v262
    %279 = vst [vmem:[#allocation2 + $0x28] sm:$0xff] %v263
    %280 = vst [vmem:[#allocation2 + $0x30] sm:$0xff] %v264
    %281 = vst [vmem:[#allocation2 + $0x38] sm:$0xff] %v265
    %282 = vst [vmem:[#allocation2 + $0x40] sm:$0xff] %v266
    %283 = vst [vmem:[#allocation2 + $0x48] sm:$0xff] %v267
    %284 = vst [vmem:[#allocation2 + $0x50] sm:$0xff] %v268
    %285 = vst [vmem:[#allocation2 + $0x58] sm:$0xff] %v269
    %286 = vst [vmem:[#allocation2 + $0x60] sm:$0xff] %v270
    %287 = vst [vmem:[#allocation2 + $0x68] sm:$0xff] %v271
    %288 = vst [vmem:[#allocation2 + $0x70] sm:$0xff] %v272
    %289 = vst [vmem:[#allocation2 + $0x78] sm:$0xff] %v273
    // Predicated region
    $region26: #{tpu_custom_call.1} parent=1 // pred_check
      %p290 = pneg %p44
    $region27: #{tpu_custom_call.1} parent=1 // pred_check_branch
      %292 = sbr.rel (%p290) target = $region29
    $region28: #{tpu_custom_call.1} parent=1 // pred_region
      %v293 = vld [vmem:[#allocation2] sm:$0xff]
      %v294 = vld [vmem:[#allocation2 + $0x8] sm:$0xff]
      %v295 = vld [vmem:[#allocation2 + $0x10] sm:$0xff]
      %v296 = vld [vmem:[#allocation2 + $0x18] sm:$0xff]
      %v297 = vld [vmem:[#allocation2 + $0x20] sm:$0xff]
      %v298 = vld [vmem:[#allocation2 + $0x28] sm:$0xff]
      %v299 = vld [vmem:[#allocation2 + $0x30] sm:$0xff]
      %v300 = vld [vmem:[#allocation2 + $0x38] sm:$0xff]
      %v301 = vld [vmem:[#allocation2 + $0x40] sm:$0xff]
      %v302 = vld [vmem:[#allocation2 + $0x48] sm:$0xff]
      %v303 = vld [vmem:[#allocation2 + $0x50] sm:$0xff]
      %v304 = vld [vmem:[#allocation2 + $0x58] sm:$0xff]
      %v305 = vld [vmem:[#allocation2 + $0x60] sm:$0xff]
      %v306 = vld [vmem:[#allocation2 + $0x68] sm:$0xff]
      %v307 = vld [vmem:[#allocation2 + $0x70] sm:$0xff]
      %v308 = vld [vmem:[#allocation2 + $0x78] sm:$0xff]
      %v309 = vmul.f32 %v293, 0.007874016
      %v310 = vmul.f32 %v294, 0.007874016
      %v311 = vmul.f32 %v295, 0.007874016
      %v312 = vmul.f32 %v296, 0.007874016
      %v313 = vmul.f32 %v297, 0.007874016
      %v314 = vmul.f32 %v298, 0.007874016
      %v315 = vmul.f32 %v299, 0.007874016
      %v316 = vmul.f32 %v300, 0.007874016
      %v317 = vmul.f32 %v301, 0.007874016
      %v318 = vmul.f32 %v302, 0.007874016
      %v319 = vmul.f32 %v303, 0.007874016
      %v320 = vmul.f32 %v304, 0.007874016
      %v321 = vmul.f32 %v305, 0.007874016
      %v322 = vmul.f32 %v306, 0.007874016
      %v323 = vmul.f32 %v307, 0.007874016
      %v324 = vmul.f32 %v308, 0.007874016
      %v325 = vld [vmem:[%s2] sm:$0x1]
      %v327 = vlaneseq
      %v328 = vshrl.u32 %v327, 7
      %v329 = vsub.s32 0, %v328
      %v330 = vrot.slane %v325, %v329
      %v332 = vadd.f32 %v309, %v330
      %v333 = vadd.f32 %v310, %v330
      %v334 = vadd.f32 %v311, %v330
      %v335 = vadd.f32 %v312, %v330
      %v336 = vadd.f32 %v313, %v330
      %v337 = vadd.f32 %v314, %v330
      %v338 = vadd.f32 %v315, %v330
      %v339 = vadd.f32 %v316, %v330
      %v340 = vadd.f32 %v317, %v330
      %v341 = vadd.f32 %v318, %v330
      %v342 = vadd.f32 %v319, %v330
      %v343 = vadd.f32 %v320, %v330
      %v344 = vadd.f32 %v321, %v330
      %v345 = vadd.f32 %v322, %v330
      %v346 = vadd.f32 %v323, %v330
      %v347 = vadd.f32 %v324, %v330
      %v348 = vtanh.pop %v332
      %v349 = vtanh.pop %v333
      %v350 = vtanh.pop %v334
      %v351 = vtanh.pop %v335
      %v352 = vtanh.pop %v336
      %v353 = vtanh.pop %v337
      %v354 = vtanh.pop %v338
      %v355 = vtanh.pop %v339
      %v356 = vtanh.pop %v340
      %v357 = vtanh.pop %v341
      %v358 = vtanh.pop %v342
      %v359 = vtanh.pop %v343
      %v360 = vtanh.pop %v344
      %v361 = vtanh.pop %v345
      %v362 = vtanh.pop %v346
      %v363 = vtanh.pop %v347
      %v364 = vpack.c.bf16 %v349, %v348
      %v365 = vpack.c.bf16 %v351, %v350
      %v366 = vpack.c.bf16 %v353, %v352
      %v367 = vpack.c.bf16 %v355, %v354
      %v368 = vpack.c.bf16 %v357, %v356
      %v369 = vpack.c.bf16 %v359, %v358
      %v370 = vpack.c.bf16 %v361, %v360
      %v371 = vpack.c.bf16 %v363, %v362
      %v380 = vunpack.c.l.b16 %v364
      %v381 = vunpack.c.h.b16 %v364
      %v382 = vunpack.c.l.b16 %v365
      %v383 = vunpack.c.h.b16 %v365
      %v384 = vunpack.c.l.b16 %v366
      %v385 = vunpack.c.h.b16 %v366
      %v386 = vunpack.c.l.b16 %v367
      %v387 = vunpack.c.h.b16 %v367
      %v388 = vunpack.c.l.b16 %v368
      %v389 = vunpack.c.h.b16 %v368
      %v390 = vunpack.c.l.b16 %v369
      %v391 = vunpack.c.h.b16 %v369
      %v392 = vunpack.c.l.b16 %v370
      %v393 = vunpack.c.h.b16 %v370
      %v394 = vunpack.c.l.b16 %v371
      %v395 = vunpack.c.h.b16 %v371
      %v396 = vpack.c.b16 %v380, %v380
      %v397 = vpack.c.b16 %v381, %v381
      %v398 = vpack.c.b16 %v382, %v382
      %v399 = vpack.c.b16 %v383, %v383
      %v400 = vpack.c.b16 %v384, %v384
      %v401 = vpack.c.b16 %v385, %v385
      %v402 = vpack.c.b16 %v386, %v386
      %v403 = vpack.c.b16 %v387, %v387
      %v404 = vpack.c.b16 %v388, %v388
      %v405 = vpack.c.b16 %v389, %v389
      %v406 = vpack.c.b16 %v390, %v390
      %v407 = vpack.c.b16 %v391, %v391
      %v408 = vpack.c.b16 %v392, %v392
      %v409 = vpack.c.b16 %v393, %v393
      %v410 = vpack.c.b16 %v394, %v394
      %v411 = vpack.c.b16 %v395, %v395
      %428 = vst [vmem:[#allocation8] sm:$0xf] %v396
      %429 = vst [vmem:[#allocation8 + $0x4] sm:$0xf] %v397
      %430 = vst [vmem:[#allocation8 + $0x8] sm:$0xf] %v398
      %431 = vst [vmem:[#allocation8 + $0xc] sm:$0xf] %v399
      %432 = vst [vmem:[#allocation8 + $0x10] sm:$0xf] %v400
      %433 = vst [vmem:[#allocation8 + $0x14] sm:$0xf] %v401
      %434 = vst [vmem:[#allocation8 + $0x18] sm:$0xf] %v402
      %435 = vst [vmem:[#allocation8 + $0x1c] sm:$0xf] %v403
      %436 = vst [vmem:[#allocation8 + $0x20] sm:$0xf] %v404
      %437 = vst [vmem:[#allocation8 + $0x24] sm:$0xf] %v405
      %438 = vst [vmem:[#allocation8 + $0x28] sm:$0xf] %v406
      %439 = vst [vmem:[#allocation8 + $0x2c] sm:$0xf] %v407
      %440 = vst [vmem:[#allocation8 + $0x30] sm:$0xf] %v408
      %441 = vst [vmem:[#allocation8 + $0x34] sm:$0xf] %v409
      %442 = vst [vmem:[#allocation8 + $0x38] sm:$0xf] %v410
      %443 = vst [vmem:[#allocation8 + $0x3c] sm:$0xf] %v411
    $region29: #{tpu_custom_call.1} parent=1 // pred_fallthru
      _
    // Predicated region
    $region30: #{tpu_custom_call.1} parent=1 // pred_check
      _
    $region31: #{tpu_custom_call.1} parent=1 // pred_check_branch
      %445 = sbr.rel (0) target = $region33
    $region32: #{tpu_custom_call.1} parent=1 // pred_region
      %s447 = ssub.s32 1024, 1024
      %448 = vsyncadd [#allocation5], %s447
      %s449 = sshll.u32 [#allocation8], 4
      %s450 = int_to_ptr.vmem [resolvable:$true] %s449
      %455 = dma.vmem_to_hbm [thread:$0]  %s450, 1024, %s3, [#allocation5], 64, 64, 4
    $region33: #{tpu_custom_call.1} parent=1 // pred_fallthru
      _
    // Predicated region
    $region34: #{tpu_custom_call.1} parent=1 // pred_check
      _
    $region35: #{tpu_custom_call.1} parent=1 // pred_check_branch
      %457 = sbr.rel (0) target = $region37
    $region36: #{tpu_custom_call.1} parent=1 // pred_region
      %458 = dma.done [#allocation5], 1024
    $region37: #{tpu_custom_call.1} parent=1 // pred_fallthru
      _
    %459 = vsyncpa [#allocation4], 1
    %460 = vsyncpa [#allocation7], 1
    %461 = vsyncpa [#allocation5], 1

</llo_original>
